<compile_context>
chip_gen: v7x
topology: tpu7x:2x2x1
jax: 0.10.0
libtpu: 0.0.40
codegen_flags: <defaults>
</compile_context>

<pallas_src>
import jax
import jax.numpy as jnp
from jax.experimental import pallas as pl
from jax.experimental.pallas import tpu as pltpu


# ----------------------------------------------------------------------------
# Kernel
# ----------------------------------------------------------------------------
def _identity_copy_kernel(x_ref, o_ref):
    # Straight VMEM tile copy (purely DMA/HBM bound; no compute unit matters).
    o_ref[...] = x_ref[...]


# ----------------------------------------------------------------------------
# Tiling helpers
# ----------------------------------------------------------------------------
# Per-operand, per-buffer tile cap.  in + out, double-buffered => 4 buffers,
# 4 * 8 MiB = 32 MiB of VMEM, under the explicit 48 MiB scoped limit below and
# under physical VMEM on v5e/v6e (128 MiB) and v7x (64 MiB).
_TILE_BYTES_CAP = 8 * 1024 * 1024
_VMEM_LIMIT_BYTES = 48 * 1024 * 1024
_LANE_WIDTHS = (1024, 512, 256, 128)


def _sublane_quantum(dtype) -> int:
    """Rows-per-vreg packing quantum for the dtype (32b->8, 16b->16, 8b->32)."""
    itemsize = jnp.dtype(dtype).itemsize
    if itemsize >= 4:
        return 8
    if itemsize == 2:
        return 16
    return 32


def _pick_lane_width(n_elements: int, quantum: int):
    """Widest lane width that divides n and keeps rows sublane-aligned."""
    for lane in _LANE_WIDTHS:
        if n_elements % lane == 0 and (n_elements // lane) % quantum == 0:
            return lane
    # Fall back: widest lane that merely divides n (single-block path only).
    for lane in _LANE_WIDTHS:
        if n_elements % lane == 0:
            return lane
    return None


def _largest_aligned_divisor_leq(n: int, quantum: int, cap: int):
    """Largest divisor of n that is a multiple of `quantum` and <= cap."""
    best = None
    d = 1
    while d * d <= n:
        if n % d == 0:
            for c in (d, n // d):
                if c <= cap and c % quantum == 0 and (best is None or c > best):
                    best = c
        d += 1
    return best


# ----------------------------------------------------------------------------
# Forward wrapper
# ----------------------------------------------------------------------------
def lora_compatible_linear_forward(hidden_states, scale=None, lora_scale: int = 1,
                                   copy: bool = False):
    """Pallas equivalent of _LoRACompatibleLinear.forward (identity).

    `scale` and `lora_scale` are accepted for API parity but unused, exactly
    as in the reference module.

    copy=False (default): zero-cost pass-through — the fastest correct
        implementation of an identity op (no HBM traffic, no kernel launch).
    copy=True: materialize the result into a fresh HBM buffer via a
        lane-dense, large-tile Pallas copy kernel.
    """
    x = jnp.asarray(hidden_states)
    if not copy or x.size == 0:
        return x

    n = x.size
    itemsize = jnp.dtype(x.dtype).itemsize
    quantum = _sublane_quantum(x.dtype)

    lane = _pick_lane_width(n, quantum)
    if lane is None:
        # Not lane-alignable without padding; plain XLA copy is the clean path.
        return x + jnp.zeros((), x.dtype)

    rows = n // lane
    max_rows = max(1, _TILE_BYTES_CAP // (lane * itemsize))

    if rows <= max_rows:
        # One block covering everything (block dim == full array dim is legal,
        # regardless of sublane alignment).
        tile_rows = rows
    else:
        tile_rows = _largest_aligned_divisor_leq(rows, quantum, max_rows)
        if tile_rows is None:
            # Cannot tile cleanly under the (quantum, 128) constraint.
            return x + jnp.zeros((), x.dtype)

    grid = (rows // tile_rows,)
    x2d = x.reshape(rows, lane)

    out2d = pl.pallas_call(
        _identity_copy_kernel,
        out_shape=jax.ShapeDtypeStruct((rows, lane), x.dtype),
        grid=grid,
        in_specs=[pl.BlockSpec((tile_rows, lane), lambda i: (i, 0))],
        out_specs=pl.BlockSpec((tile_rows, lane), lambda i: (i, 0)),
        compiler_params=pltpu.CompilerParams(
            dimension_semantics=("parallel",),
            vmem_limit_bytes=_VMEM_LIMIT_BYTES,
        ),
    )(x2d)

    return out2d.reshape(x.shape)


# ----------------------------------------------------------------------------
# Self-test
# ----------------------------------------------------------------------------
if __name__ == "__main__":
    key = jax.random.PRNGKey(0)

    # Shape consistent with a linear-layer call site: (batch, seq, hidden).
    B, S, H = 2, 8, 32
    hidden_states = jax.random.normal(key, (B, S, H), dtype=jnp.float32)

    # Default (fast) path: pure pass-through, no kernel launch.
    out = lora_compatible_linear_forward(hidden_states, scale=None, lora_scale=1)
    out = jax.block_until_ready(out)
    assert out.shape == hidden_states.shape
    assert out.dtype == hidden_states.dtype
    assert bool(jnp.all(out == hidden_states))

    # Fresh-buffer path: exercises the Pallas copy kernel (f32, single block).
    out_copy = lora_compatible_linear_forward(hidden_states, copy=True)
    out_copy = jax.block_until_ready(out_copy)
    assert out_copy.shape == hidden_states.shape
    assert out_copy.dtype == hidden_states.dtype
    assert bool(jnp.all(out_copy == hidden_states))

    # bf16 case: exercises the dtype-aware (16-row) sublane quantum and a
    # lane-dense (rows=16, lane=1024) slab through the kernel.
    key2 = jax.random.PRNGKey(0)
    hs2 = jax.random.normal(key2, (4, 32, 128), dtype=jnp.bfloat16)
    out2 = jax.block_until_ready(lora_compatible_linear_forward(hs2, copy=True))
    assert out2.shape == hs2.shape and out2.dtype == hs2.dtype
    assert bool(jnp.all(out2 == hs2))

    print("KERNEL_OK")
</pallas_src>

<mosaic_0001>
module attributes {stable_mosaic.version = 11 : i64} {
  func.func @_identity_copy_kernel(%arg0: i32, %arg1: memref<1x512xf32, #tpu.memory_space<vmem>>, %arg2: memref<1x512xf32, #tpu.memory_space<vmem>>) attributes {dimension_semantics = [#tpu.dimension_semantics<parallel>], iteration_bounds = array<i64: 1>, scalar_prefetch = 0 : i64, scratch_operands = 0 : i64, tpu.core_type = #tpu.core_type<tc>, window_params = [{transform_indices = @transform_0, window_bounds = array<i64: 1, 512>}, {transform_indices = @transform_1, window_bounds = array<i64: 1, 512>}]} {
    %c0 = arith.constant 0 : index
    %c0_0 = arith.constant 0 : index
    %0 = vector.load %arg1[%c0, %c0_0] : memref<1x512xf32, #tpu.memory_space<vmem>>, vector<1x512xf32>
    %c0_1 = arith.constant 0 : index
    %c0_2 = arith.constant 0 : index
    %1 = vector.load %arg2[%c0_1, %c0_2] : memref<1x512xf32, #tpu.memory_space<vmem>>, vector<1x512xf32>
    tpu.vector_store %arg2[%c0_1, %c0_2], %0 {strides = array<i32>} : memref<1x512xf32, #tpu.memory_space<vmem>>, vector<1x512xf32>,
    return
  }
  func.func @transform_0(%arg0: i32) -> (i32, i32) {
    %c0_i32 = arith.constant 0 : i32
    %c0_i32_0 = arith.constant 0 : i32
    return %arg0, %c0_i32 : i32, i32
  }
  func.func @transform_1(%arg0: i32) -> (i32, i32) {
    %c0_i32 = arith.constant 0 : i32
    %c0_i32_0 = arith.constant 0 : i32
    return %arg0, %c0_i32 : i32, i32
  }
}

</mosaic_0001>

<llo_original>
// kernel: tpu_custom_call.1
$region0: #{tpu_custom_call.1}
  #allocation0 [shape = 'u32[]', space=smem, size = 0x4, offset = 0x4, fixed_abs, tag = 'smem constant byte address 0x4 - core index']
  #allocation1 [shape = 'u32[144,128]{1,0:T(1,128)}', space=vmem, size = 0x12000, scoped, tag = 'internal scratch']
  %s0 = inlined_call_operand.hbm [shape: f32[1,512], index: 0, kind: input, shape index: {}]
  %s1 = inlined_call_operand.hbm [shape: f32[1,512], index: 1, kind: output, shape index: {}]
  %s2 = sld [smem:[#allocation0]]
  $region18: #{tpu_custom_call.1} parent=0
    _
  %s4 = ssub.s32 1, %s2
  %s5 = scalar_select 0, %s4, %s2
  $region1: #{tpu_custom_call.1} parent=0
    #allocation2 [shape = 'u8[2048]{0}', space=vmem, size = 0x800, scoped, tag = 'input window, operand 0, single buffered']
    #allocation3 [shape = 's32[1]{0}', space=sflag, size = 0x4, scoped, tag = 'scoped memory for tpu_custom_call.1']
    #allocation4 [shape = 's32[1]{0}', space=sflag, size = 0x4, scoped, tag = 'scoped memory for tpu_custom_call.1']
    #allocation5 [shape = 'u8[2048]{0}', space=vmem, size = 0x800, scoped, tag = 'output window, operand 0, single buffered']
    %6 = vsyncpa [#allocation3], 0
    %7 = vsyncpa [#allocation4], 0
    // Predicated region
    $region2: #{tpu_custom_call.1} parent=1 // pred_check
      _
    $region3: #{tpu_custom_call.1} parent=1 // pred_check_branch
      %9 = sbr.rel (0) target = $region5
    $region4: #{tpu_custom_call.1} parent=1 // pred_region
      %s11 = ssub.s32 64, 64
      %12 = vsyncadd [#allocation3], %s11
      %s14 = sshll.u32 [#allocation2], 4
      %s15 = int_to_ptr.vmem [resolvable:$true] %s14
      %17 = dma.hbm_to_vmem [thread:$0]  %s0, 64, %s15, [#allocation3]
    $region5: #{tpu_custom_call.1} parent=1 // pred_fallthru
      _
    // Predicated region
    $region6: #{tpu_custom_call.1} parent=1 // pred_check
      _
    $region7: #{tpu_custom_call.1} parent=1 // pred_check_branch
      %19 = sbr.rel (0) target = $region9
    $region8: #{tpu_custom_call.1} parent=1 // pred_region
      %20 = dma.done [#allocation3], 64
    $region9: #{tpu_custom_call.1} parent=1 // pred_fallthru
      _
    %v21 = vld [vmem:[#allocation2] sm:$0xf]
    %v22 = vlaneseq
    %vm23 = vcmp.ge.s32.totalorder %v22, 0
    %vm24 = vcmp.lt.s32.totalorder %v22, 512
    %vm25 = vmand %vm23, %vm24
    %26 = vst.msk [vmem:[#allocation5] sm:$0xf] %vm25, %v21
    // Predicated region
    $region10: #{tpu_custom_call.1} parent=1 // pred_check
      _
    $region11: #{tpu_custom_call.1} parent=1 // pred_check_branch
      %28 = sbr.rel (0) target = $region13
    $region12: #{tpu_custom_call.1} parent=1 // pred_region
      %s30 = ssub.s32 64, 64
      %31 = vsyncadd [#allocation4], %s30
      %s33 = sshll.u32 [#allocation5], 4
      %s34 = int_to_ptr.vmem [resolvable:$true] %s33
      %36 = dma.vmem_to_hbm [thread:$0]  %s34, 64, %s1, [#allocation4]
    $region13: #{tpu_custom_call.1} parent=1 // pred_fallthru
      _
    // Predicated region
    $region14: #{tpu_custom_call.1} parent=1 // pred_check
      _
    $region15: #{tpu_custom_call.1} parent=1 // pred_check_branch
      %38 = sbr.rel (0) target = $region17
    $region16: #{tpu_custom_call.1} parent=1 // pred_region
      %39 = dma.done [#allocation4], 64
    $region17: #{tpu_custom_call.1} parent=1 // pred_fallthru
      _
    %40 = vsyncpa [#allocation3], 1
    %41 = vsyncpa [#allocation4], 1

</llo_original>
